<compile_context>
chip_gen: v7x
topology: tpu7x:2x2x1
jax: 0.10.0
libtpu: 0.0.40
codegen_flags: <defaults>
</compile_context>

<pallas_src>
import functools

import jax
import jax.numpy as jnp
import numpy as np
from jax.experimental import pallas as pl
from jax.experimental.pallas import tpu as pltpu


def robot_solver_kernel(x_ref, w_ref, b_ref, u_ref):
    # ratio = 1 + (sigmoid(x) - 0.5) == 0.5 + sigmoid(x)
    ratio = 0.5 + jax.nn.sigmoid(x_ref[...])                       # (TB, n)
    u_ref[...] = (
        jnp.dot(ratio, w_ref[...], preferred_element_type=jnp.float32)
        + b_ref[...]                                               # (1, D) broadcast
    )


@functools.partial(jax.jit, static_argnames=("block_b",))
def robot_solver_forward(x, angles, disp, joints, coo_diff,
                         m1, m2, m3, m4, mlast, *, block_b=256):
    """x: (B, n); angles: (n,); disp: (n_disp,); joints: (2, half);
    coo_diff: (4, half); m1..m4: (half, D); mlast: (n_disp, D)."""
    B, n = x.shape
    half = n // 2
    D = m1.shape[1]

    # ---- parameter folding (plain JAX, once per call, O(half*D)) -----------
    # triu contraction over suffixes <=> cumsum(M, axis=0)
    c1 = jnp.cumsum(m1, axis=0)
    c2 = jnp.cumsum(m2, axis=0)
    c3 = jnp.cumsum(m3, axis=0)
    c4 = jnp.cumsum(m4, axis=0)
    cos_l = jnp.cos(angles[:half])[:, None]
    sin_l = jnp.sin(angles[:half])[:, None]
    cos_r = jnp.cos(angles[half:])[:, None]
    sin_r = jnp.sin(angles[half:])[:, None]
    w_left = joints[0][:, None] * (cos_l * c1 + sin_l * c2)        # (half, D)
    w_right = joints[1][:, None] * (cos_r * c3 + sin_r * c4)       # (half, D)
    W = jnp.concatenate([w_left, w_right], axis=0)                 # (n, D)
    bias = (coo_diff[0] @ m1 + coo_diff[1] @ m2
            + coo_diff[2] @ m3 + coo_diff[3] @ m4
            + disp @ mlast)[None, :]                               # (1, D)

    # ---- batch tiling (pad to a multiple of the tile for (8,128) safety) ----
    if B <= block_b:
        tb = B                                  # single tile: block == full dim
    else:
        tb = max(8, (block_b // 8) * 8)         # sublane-aligned batch tile
    Bp = -(-B // tb) * tb
    if Bp != B:
        x = jnp.pad(x, ((0, Bp - B), (0, 0)))
    grid = (Bp // tb,)

    cost = pl.CostEstimate(
        flops=2 * Bp * n * D,
        transcendentals=Bp * n,
        bytes_accessed=4 * (Bp * n + n * D + Bp * D + D),
    )

    out = pl.pallas_call(
        robot_solver_kernel,
        out_shape=jax.ShapeDtypeStruct((Bp, D), jnp.float32),
        grid=grid,
        in_specs=[
            pl.BlockSpec((tb, n), lambda i: (i, 0)),   # x batch tile
            pl.BlockSpec((n, D), lambda i: (0, 0)),    # folded weight, resident
            pl.BlockSpec((1, D), lambda i: (0, 0)),    # folded bias, resident
        ],
        out_specs=pl.BlockSpec((tb, D), lambda i: (i, 0)),
        compiler_params=pltpu.CompilerParams(
            dimension_semantics=("parallel",)),
        cost_estimate=cost,
    )(x, W, bias)
    return out[:B] if Bp != B else out


def robot_solver_reference(x, angles, disp, joints, coo_diff,
                           m1, m2, m3, m4, mlast):
    """Pure-JAX transcription of the PyTorch forward (for validation)."""
    half = x.shape[1] // 2
    ratio = 1.0 + (jax.nn.sigmoid(x) - 0.5)
    rods_l = ratio[:, :half] * joints[0]
    rods_r = ratio[:, half:] * joints[1]
    new_l = jnp.triu(jnp.repeat(rods_l[:, None, :], half, axis=1))
    new_r = jnp.triu(jnp.repeat(rods_r[:, None, :], half, axis=1))
    cos_l = jnp.cos(angles[:half]); sin_l = jnp.sin(angles[:half])
    cos_r = jnp.cos(angles[half:]); sin_r = jnp.sin(angles[half:])
    lx = jnp.einsum('bij,j->bi', new_l, cos_l) + coo_diff[0]
    ly = jnp.einsum('bij,j->bi', new_l, sin_l) + coo_diff[1]
    rx = jnp.einsum('bij,j->bi', new_r, cos_r) + coo_diff[2]
    ry = jnp.einsum('bij,j->bi', new_r, sin_r) + coo_diff[3]
    u = lx @ m1 + ly @ m2 + rx @ m3 + ry @ m4
    int_u = disp[None, :] @ mlast
    return u + int_u


if __name__ == "__main__":
    # Small, shape-consistent problem:
    #   shapes[0] = 32  -> n_rods = 16, half = 8
    #   shapes[1] = 16  -> disp param size
    #   D = 128         -> output DOF count (multiple of 128: lane-dense store)
    B, n, n_disp, D = 8, 16, 16, 128
    half = n // 2

    key = jax.random.PRNGKey(0)
    ks = jax.random.split(key, 9)

    x = jax.random.normal(ks[0], (B, n), dtype=jnp.float32)

    # graph_info (deterministic synthetic):
    joints = jax.random.uniform(ks[1], (2, half), dtype=jnp.float32,
                                minval=0.5, maxval=1.5)
    coo_diff = 0.1 * jax.random.normal(ks[2], (4, half), dtype=jnp.float32)
    m1 = 0.1 * jax.random.normal(ks[3], (half, D), dtype=jnp.float32)
    m2 = 0.1 * jax.random.normal(ks[4], (half, D), dtype=jnp.float32)
    m3 = 0.1 * jax.random.normal(ks[5], (half, D), dtype=jnp.float32)
    m4 = 0.1 * jax.random.normal(ks[6], (half, D), dtype=jnp.float32)
    mlast = 0.1 * jax.random.normal(ks[7], (n_disp, D), dtype=jnp.float32)

    # Parameter init exactly as in RobotSolver.__init__:
    #   para = cat(zeros(shapes[0]//2) + 0.5*pi, zeros(shapes[1]))
    para_angles = jnp.zeros((n,), dtype=jnp.float32) + 0.5 * np.pi
    para_disp = jnp.zeros((n_disp,), dtype=jnp.float32)

    # --- case 1: single-tile path ---
    u = robot_solver_forward(x, para_angles, para_disp, joints, coo_diff,
                             m1, m2, m3, m4, mlast)
    u = jax.block_until_ready(u)
    u_ref = robot_solver_reference(x, para_angles, para_disp, joints, coo_diff,
                                   m1, m2, m3, m4, mlast)
    assert u.shape == (B, D)
    assert jnp.allclose(u, u_ref, atol=1e-4, rtol=1e-4), "mismatch (single tile)"

    # --- case 2: multi-tile path with batch padding (B=20, tile=16) ---
    B2 = 20
    x2 = jax.random.normal(ks[8], (B2, n), dtype=jnp.float32)
    u2 = robot_solver_forward(x2, para_angles, para_disp, joints, coo_diff,
                              m1, m2, m3, m4, mlast, block_b=16)
    u2 = jax.block_until_ready(u2)
    u2_ref = robot_solver_reference(x2, para_angles, para_disp, joints,
                                    coo_diff, m1, m2, m3, m4, mlast)
    assert u2.shape == (B2, D)
    assert jnp.allclose(u2, u2_ref, atol=1e-4, rtol=1e-4), "mismatch (tiled/padded)"

    print("KERNEL_OK")
</pallas_src>

<mosaic_0001>
module attributes {stable_mosaic.version = 11 : i64} {
  func.func @robot_solver_kernel(%arg0: i32, %arg1: memref<8x16xf32, #tpu.memory_space<vmem>>, %arg2: memref<16x128xf32, #tpu.memory_space<vmem>>, %arg3: memref<1x128xf32, #tpu.memory_space<vmem>>, %arg4: memref<8x128xf32, #tpu.memory_space<vmem>>) attributes {dimension_semantics = [#tpu.dimension_semantics<parallel>], iteration_bounds = array<i64: 1>, scalar_prefetch = 0 : i64, scratch_operands = 0 : i64, tpu.core_type = #tpu.core_type<tc>, window_params = [{transform_indices = @transform_0, window_bounds = array<i64: 8, 16>}, {pipeline_mode = #tpu.pipeline_mode<synchronous>, transform_indices = @transform_1, window_bounds = array<i64: 16, 128>}, {pipeline_mode = #tpu.pipeline_mode<synchronous>, transform_indices = @transform_2, window_bounds = array<i64: 1, 128>}, {transform_indices = @transform_3, window_bounds = array<i64: 8, 128>}]} {
    %c0 = arith.constant 0 : index
    %c0_0 = arith.constant 0 : index
    %0 = vector.load %arg1[%c0, %c0_0] : memref<8x16xf32, #tpu.memory_space<vmem>>, vector<8x16xf32>
    %1 = arith.negf %0 : vector<8x16xf32>
    %2 = math.exp %1 : vector<8x16xf32>
    %cst = arith.constant 1.000000e+00 : f32
    %3 = vector.broadcast %cst : f32 to vector<8x16xf32>
    %4 = arith.addf %3, %2 : vector<8x16xf32>
    %5 = arith.divf %3, %4 : vector<8x16xf32>
    %cst_1 = arith.constant 5.000000e-01 : f32
    %6 = vector.broadcast %cst_1 : f32 to vector<8x16xf32>
    %7 = arith.addf %6, %5 : vector<8x16xf32>
    %c0_2 = arith.constant 0 : index
    %c0_3 = arith.constant 0 : index
    %8 = vector.load %arg2[%c0_2, %c0_3] : memref<16x128xf32, #tpu.memory_space<vmem>>, vector<16x128xf32>
    %cst_4 = arith.constant dense<0.000000e+00> : vector<8x128xf32>
    %9 = tpu.matmul %7, %8, %cst_4 {dimension_numbers = #tpu.dot_dimension_numbers<[1], [0], [0], [1], [0, 0, 1, 1], [], []>} : vector<8x16xf32>, vector<16x128xf32>, vector<8x128xf32> -> vector<8x128xf32>
    %c0_5 = arith.constant 0 : index
    %c0_6 = arith.constant 0 : index
    %10 = vector.load %arg3[%c0_5, %c0_6] : memref<1x128xf32, #tpu.memory_space<vmem>>, vector<1x128xf32>
    %11 = vector.broadcast %10 : vector<1x128xf32> to vector<8x128xf32>
    %12 = arith.addf %9, %11 : vector<8x128xf32>
    %c0_7 = arith.constant 0 : index
    %c0_8 = arith.constant 0 : index
    %13 = vector.load %arg4[%c0_7, %c0_8] : memref<8x128xf32, #tpu.memory_space<vmem>>, vector<8x128xf32>
    tpu.vector_store %arg4[%c0_7, %c0_8], %12 {strides = array<i32>} : memref<8x128xf32, #tpu.memory_space<vmem>>, vector<8x128xf32>,
    return
  }
  func.func @transform_0(%arg0: i32) -> (i32, i32) {
    %c0_i32 = arith.constant 0 : i32
    %c0_i32_0 = arith.constant 0 : i32
    return %arg0, %c0_i32 : i32, i32
  }
  func.func @transform_1(%arg0: i32) -> (i32, i32) {
    %c0_i32 = arith.constant 0 : i32
    %c0_i32_0 = arith.constant 0 : i32
    %c0_i32_1 = arith.constant 0 : i32
    return %c0_i32, %c0_i32_0 : i32, i32
  }
  func.func @transform_2(%arg0: i32) -> (i32, i32) {
    %c0_i32 = arith.constant 0 : i32
    %c0_i32_0 = arith.constant 0 : i32
    %c0_i32_1 = arith.constant 0 : i32
    return %c0_i32, %c0_i32_0 : i32, i32
  }
  func.func @transform_3(%arg0: i32) -> (i32, i32) {
    %c0_i32 = arith.constant 0 : i32
    %c0_i32_0 = arith.constant 0 : i32
    return %arg0, %c0_i32 : i32, i32
  }
}

</mosaic_0001>

<llo_original>
// kernel: robot_solver_forward.1
$region0: #{robot_solver_forward.1}
  #allocation0 [shape = 'u32[]', space=smem, size = 0x4, offset = 0x4, fixed_abs, tag = 'smem constant byte address 0x4 - core index']
  #allocation1 [shape = 'u32[144,128]{1,0:T(1,128)}', space=vmem, size = 0x12000, scoped, tag = 'internal scratch']
  %s0 = inlined_call_operand.vmem [shape: f32[8,16], index: 0, kind: input, shape index: {}]
  %s1 = inlined_call_operand.vmem [shape: f32[16,128], index: 1, kind: input, shape index: {}]
  %s2 = inlined_call_operand.vmem [shape: f32[1,128], index: 2, kind: input, shape index: {}]
  %s3 = inlined_call_operand.hbm [shape: f32[8,128], index: 3, kind: output, shape index: {}]
  %s4 = sld [smem:[#allocation0]]
  $region22: #{robot_solver_forward.1} parent=0
    _
  %s6 = ssub.s32 1, %s4
  %s7 = scalar_select 0, %s6, %s4
  $region1: #{robot_solver_forward.1} parent=0
    #allocation2 [shape = 'u8[4096]{0}', space=vmem, size = 0x1000, scoped, tag = 'output window, operand 0, single buffered']
    #allocation3 [shape = 's32[1]{0}', space=sflag, size = 0x4, scoped, tag = 'scoped memory for robot_solver_forward.1']
    %8 = vsyncpa [#allocation3], 0
    // Predicated region
    $region2: #{robot_solver_forward.1} parent=1 // pred_check
      _
    $region3: #{robot_solver_forward.1} parent=1 // pred_check_branch
      %10 = sbr.rel (0) target = $region5
    $region4: #{robot_solver_forward.1} parent=1 // pred_region
      _
    $region5: #{robot_solver_forward.1} parent=1 // pred_fallthru
      _
    // Predicated region
    $region6: #{robot_solver_forward.1} parent=1 // pred_check
      _
    $region7: #{robot_solver_forward.1} parent=1 // pred_check_branch
      %12 = sbr.rel (0) target = $region9
    $region8: #{robot_solver_forward.1} parent=1 // pred_region
      _
    $region9: #{robot_solver_forward.1} parent=1 // pred_fallthru
      _
    // Predicated region
    $region10: #{robot_solver_forward.1} parent=1 // pred_check
      _
    $region11: #{robot_solver_forward.1} parent=1 // pred_check_branch
      %14 = sbr.rel (0) target = $region13
    $region12: #{robot_solver_forward.1} parent=1 // pred_region
      _
    $region13: #{robot_solver_forward.1} parent=1 // pred_fallthru
      _
    %v15 = vld [vmem:[%s0] sm:$0xff]
    %v16 = vxor.u32 %v15, 2147483648
    %v17 = vmul.f32 %v16, 1.442695
    %v18 = vpow.pop %v17
    %v19 = vadd.f32 %v18, 1.0
    %v20 = vrcp.pop %v19
    %v21 = vmul.f32 1.0, %v20
    %v22 = vadd.f32 %v21, 0.5
    %v23 = vld [vmem:[%s1] sm:$0xff]
    %v24 = vld [vmem:[%s1 + $0x8] sm:$0xff]
    %v25 = vld [vmem:[%s2] sm:$0x1]
    %v27 = vlaneseq
    %v28 = vshrl.u32 %v27, 7
    %v29 = vsub.s32 0, %v28
    %v30 = vrot.slane %v25, %v29
    %vm32 = vcmask 130048
    %v34 = vsel %vm32, %v22, 0
    %36 = vmatprep.subr.mxu0 0.0
    %37 = vmatpush1.msra.mxu0 %v23
    %38 = vmatprep.subr.mxu0 0.0
    %39 = vmatpush1.msra.mxu0 %v24
    %40 = vmatprep.subr.mxu0 0.0
    %41 = vmatpush1.msra.mxu0 0.0
    %42 = vmatprep.subr.mxu0 0.0
    %43 = vmatpush1.msra.mxu0 0.0
    %44 = vmatprep.subr.mxu0 0.0
    %45 = vmatpush1.msra.mxu0 0.0
    %46 = vmatprep.subr.mxu0 0.0
    %47 = vmatpush1.msra.mxu0 0.0
    %48 = vmatprep.subr.mxu0 0.0
    %49 = vmatpush1.msra.mxu0 0.0
    %50 = vmatprep.subr.mxu0 0.0
    %51 = vmatpush1.msra.mxu0 0.0
    %52 = vmatprep.subr.mxu0 0.0
    %53 = vmatpush1.msra.mxu0 0.0
    %54 = vmatprep.subr.mxu0 0.0
    %55 = vmatpush1.msra.mxu0 0.0
    %56 = vmatprep.subr.mxu0 0.0
    %57 = vmatpush1.msra.mxu0 0.0
    %58 = vmatprep.subr.mxu0 0.0
    %59 = vmatpush1.msra.mxu0 0.0
    %60 = vmatprep.subr.mxu0 0.0
    %61 = vmatpush1.msra.mxu0 0.0
    %62 = vmatprep.subr.mxu0 0.0
    %63 = vmatpush1.msra.mxu0 0.0
    %64 = vmatprep.subr.mxu0 0.0
    %65 = vmatpush1.msra.mxu0 0.0
    %66 = vmatprep.subr.mxu0 0.0
    %67 = vmatpush1.msra.mxu0 0.0
    %68 = vmatprep.subr.mxu0 0.0
    %69 = vmatpush1.msra.mxu0 0.0
    %70 = vmatprep.subr.mxu0 0.0
    %71 = vmatpush1.msra.mxu0 0.0
    %72 = vmatprep.subr.mxu0 0.0
    %73 = vmatpush1.msra.mxu0 0.0
    %74 = vmatprep.subr.mxu0 0.0
    %75 = vmatpush1.msra.mxu0 0.0
    %76 = vmatprep.subr.mxu0 0.0
    %77 = vmatpush1.msra.mxu0 0.0
    %78 = vmatprep.subr.mxu0 0.0
    %79 = vmatpush1.msra.mxu0 0.0
    %80 = vmatprep.subr.mxu0 0.0
    %81 = vmatpush1.msra.mxu0 0.0
    %82 = vmatprep.subr.mxu0 0.0
    %83 = vmatpush1.msra.mxu0 0.0
    %84 = vmatprep.subr.mxu0 0.0
    %85 = vmatpush1.msra.mxu0 0.0
    %86 = vmatprep.subr.mxu0 0.0
    %87 = vmatpush1.msra.mxu0 0.0
    %88 = vmatprep.subr.mxu0 0.0
    %89 = vmatpush1.msra.mxu0 0.0
    %90 = vmatprep.subr.mxu0 0.0
    %91 = vmatpush1.msra.mxu0 0.0
    %92 = vmatprep.subr.mxu0 0.0
    %93 = vmatpush1.msra.mxu0 0.0
    %94 = vmatprep.subr.mxu0 0.0
    %95 = vmatpush1.msra.mxu0 0.0
    %96 = vmatprep.subr.mxu0 0.0
    %97 = vmatpush1.msra.mxu0 0.0
    %98 = vmatprep.subr.mxu0 0.0
    %99 = vmatpush1.msra.mxu0 0.0
    %100 = vmatprep.mubr.f32.mxu0 0.0
    %101 = vmatmul.mubr.f32.gmra.mrb[0].mxu0 %v34
    %v102 = vpop.f32.mrb[0].mxu0
    %v103 = vadd.f32 %v30, %v102
    %v104 = vpop.f32.mrb[0].mxu0
    %105 = vdwg.mxu0
    %106 = vst [vmem:[#allocation2] sm:$0xff] %v103
    // Predicated region
    $region14: #{robot_solver_forward.1} parent=1 // pred_check
      _
    $region15: #{robot_solver_forward.1} parent=1 // pred_check_branch
      %108 = sbr.rel (0) target = $region17
    $region16: #{robot_solver_forward.1} parent=1 // pred_region
      %s110 = ssub.s32 128, 128
      %111 = vsyncadd [#allocation3], %s110
      %s113 = sshll.u32 [#allocation2], 4
      %s114 = int_to_ptr.vmem [resolvable:$true] %s113
      %116 = dma.vmem_to_hbm [thread:$0]  %s114, 128, %s3, [#allocation3]
    $region17: #{robot_solver_forward.1} parent=1 // pred_fallthru
      _
    // Predicated region
    $region18: #{robot_solver_forward.1} parent=1 // pred_check
      _
    $region19: #{robot_solver_forward.1} parent=1 // pred_check_branch
      %118 = sbr.rel (0) target = $region21
    $region20: #{robot_solver_forward.1} parent=1 // pred_region
      %119 = dma.done [#allocation3], 128
    $region21: #{robot_solver_forward.1} parent=1 // pred_fallthru
      _
    %120 = vsyncpa [#allocation3], 1

</llo_original>
